<compile_context>
chip_gen: v5e
topology: v5e:2x2
jax: 0.10.0
libtpu: 0.0.40
codegen_flags: <defaults>
</compile_context>

<pallas_src>
import math
import functools

import jax
import jax.numpy as jnp
from jax.experimental import pallas as pl
from jax.experimental.pallas import tpu as pltpu

LN_EPS = 1e-5  # torch.nn.LayerNorm default


def _round_up(x, m):
    return (x + m - 1) // m * m


def _gelu(x):
    # tanh-approximate GELU (same formula as the pure-JAX reference below)
    c = 0.7978845608028654  # sqrt(2/pi)
    return 0.5 * x * (1.0 + jnp.tanh(c * (x + 0.044715 * x * x * x)))


# --------------------------------------------------------------------------
# VMEM / tiling helpers (generation-aware, conservative fallbacks)
# --------------------------------------------------------------------------
def _vmem_capacity_bytes():
    try:
        return int(pltpu.get_tpu_info().vmem_capacity_bytes)
    except Exception:
        return 64 * 1024 * 1024  # conservative: v7x per-TensorCore VMEM


def _maybe_vmem_limit(footprint_bytes):
    """Raise scoped-VMEM only when the working set needs it; never above ~3/4
    of physical VMEM (v7x only has 64 MiB per TC, v5e default scoped is 16 MiB)."""
    if footprint_bytes <= 12 * 1024 * 1024:
        return None
    cap = _vmem_capacity_bytes()
    return int(min(max(2 * footprint_bytes, 32 * 1024 * 1024), (cap * 3) // 4))


def _compiler_params(dimension_semantics, footprint_bytes=0):
    limit = _maybe_vmem_limit(footprint_bytes)
    if limit is None:
        return pltpu.CompilerParams(dimension_semantics=dimension_semantics)
    return pltpu.CompilerParams(dimension_semantics=dimension_semantics,
                                vmem_limit_bytes=limit)


def _default_gemm_blocks():
    # 256x256 output tiles are HBM-bound on every generation; pick larger
    # output tiles keyed off available VMEM:
    #   v5e / v6e (128 MiB physical) -> 1024 x 1024 x 512
    #   v7x       (64 MiB per TC)    ->  512 x  512 x 512
    cap = _vmem_capacity_bytes()
    if cap >= 100 * 1024 * 1024:
        return 1024, 1024, 512
    return 512, 512, 512


# --------------------------------------------------------------------------
# Kernel 1: standalone LayerNorm (generic path for arbitrary `fn`)
# --------------------------------------------------------------------------
def _layernorm_kernel(x_ref, g_ref, b_ref, o_ref):
    x = x_ref[...].astype(jnp.float32)
    mean = jnp.mean(x, axis=-1, keepdims=True)
    xc = x - mean
    var = jnp.mean(xc * xc, axis=-1, keepdims=True)
    y = xc * jax.lax.rsqrt(var + LN_EPS) * g_ref[...] + b_ref[...]
    o_ref[...] = y.astype(o_ref.dtype)


def layer_norm(x, gamma, beta, *, out_dtype=jnp.bfloat16, block_m=None):
    """LayerNorm over the last dim of x (any leading shape)."""
    orig_shape = x.shape
    d = orig_shape[-1]
    m = math.prod(orig_shape[:-1])
    x2 = x.reshape(m, d)

    in_bytes = x2.dtype.itemsize
    out_bytes = jnp.dtype(out_dtype).itemsize
    if block_m is None:
        # Pure memory traffic: size each block at ~4 MiB so the ~0.35us
        # per-grid-step overhead is amortized (scales with d instead of a
        # fixed 256 rows).
        block_m = max(256, (4 << 20) // max(1, d * (in_bytes + out_bytes)))
        block_m = min(block_m, 8192)
    # round to 16 rows: bf16 min tile is (16, 128)
    tm = min(_round_up(block_m, 16), _round_up(m, 16))
    mp = _round_up(m, tm)
    if mp != m:
        x2 = jnp.pad(x2, ((0, mp - m), (0, 0)))

    footprint = 2 * tm * d * (in_bytes + out_bytes) + 4 * d * 4

    out = pl.pallas_call(
        _layernorm_kernel,
        out_shape=jax.ShapeDtypeStruct((mp, d), out_dtype),
        grid=(mp // tm,),
        in_specs=[
            pl.BlockSpec((tm, d), lambda i: (i, 0)),
            pl.BlockSpec((1, d), lambda i: (0, 0)),
            pl.BlockSpec((1, d), lambda i: (0, 0)),
        ],
        out_specs=pl.BlockSpec((tm, d), lambda i: (i, 0)),
        compiler_params=_compiler_params(("parallel",), footprint),
    )(x2,
      gamma.astype(jnp.float32).reshape(1, d),
      beta.astype(jnp.float32).reshape(1, d))
    if mp != m:
        out = out[:m]
    return out.reshape(orig_shape)


# --------------------------------------------------------------------------
# Kernel 2: GEMM with fused bias + activation epilogue (bf16 in, f32 acc).
#   For f32 outputs the accumulation happens directly into the k-resident
#   output block (no acc scratch, frees VMEM for bigger tiles).
# --------------------------------------------------------------------------
def _matmul_bias_act_kernel(a_ref, w_ref, b_ref, o_ref, *scratch, act, use_acc):
    k = pl.program_id(2)
    acc_ref = scratch[0] if use_acc else o_ref

    @pl.when(k == 0)
    def _():
        acc_ref[...] = jnp.zeros_like(acc_ref)

    acc_ref[...] += jnp.dot(a_ref[...], w_ref[...],
                            preferred_element_type=jnp.float32)

    @pl.when(k == pl.num_programs(2) - 1)
    def _():
        y = acc_ref[...] + b_ref[...]
        if act == "gelu":
            y = _gelu(y)
        o_ref[...] = y.astype(o_ref.dtype)


def matmul_bias_act(a, w, bias, *, act=None, out_dtype=jnp.bfloat16,
                    block_m=None, block_n=None, block_k=None):
    """(M,K)@(K,N) + bias, optional GELU, fused in the matmul epilogue."""
    m, k = a.shape
    n = w.shape[1]
    if a.dtype != jnp.bfloat16:
        a = a.astype(jnp.bfloat16)
    if w.dtype != jnp.bfloat16:
        w = w.astype(jnp.bfloat16)
    if bias.dtype != jnp.float32:
        bias = bias.astype(jnp.float32)

    dbm, dbn, dbk = _default_gemm_blocks()
    block_m = dbm if block_m is None else block_m
    block_n = dbn if block_n is None else block_n
    block_k = dbk if block_k is None else block_k

    tm = min(block_m, _round_up(m, 16))
    tn = min(block_n, _round_up(n, 128))
    tk = min(block_k, _round_up(k, 128))
    mp, np_, kp = _round_up(m, tm), _round_up(n, tn), _round_up(k, tk)
    if (mp, kp) != (m, k):
        a = jnp.pad(a, ((0, mp - m), (0, kp - k)))
    if (kp, np_) != (k, n):
        w = jnp.pad(w, ((0, kp - k), (0, np_ - n)))
    if np_ != n:
        bias = jnp.pad(bias, (0, np_ - n))
    bias2 = bias.reshape(1, np_)

    out_isz = jnp.dtype(out_dtype).itemsize
    use_acc = jnp.dtype(out_dtype) != jnp.dtype(jnp.float32)
    scratch_shapes = [pltpu.VMEM((tm, tn), jnp.float32)] if use_acc else []

    footprint = (2 * (tm * tk + tk * tn) * 2 + 2 * tm * tn * out_isz
                 + (tm * tn * 4 if use_acc else 0) + 4 * tn * 4)
    cost = pl.CostEstimate(
        flops=2 * mp * kp * np_,
        transcendentals=(mp * np_ if act == "gelu" else 0),
        bytes_accessed=(mp * kp * 2 * (np_ // tn) + kp * np_ * 2 * (mp // tm)
                        + np_ * 4 + mp * np_ * out_isz),
    )
    out = pl.pallas_call(
        functools.partial(_matmul_bias_act_kernel, act=act, use_acc=use_acc),
        out_shape=jax.ShapeDtypeStruct((mp, np_), out_dtype),
        grid_spec=pltpu.PrefetchScalarGridSpec(
            num_scalar_prefetch=0,
            grid=(mp // tm, np_ // tn, kp // tk),
            in_specs=[
                pl.BlockSpec((tm, tk), lambda i, j, kk: (i, kk)),
                pl.BlockSpec((tk, tn), lambda i, j, kk: (kk, j)),
                pl.BlockSpec((1, tn), lambda i, j, kk: (0, j)),
            ],
            out_specs=pl.BlockSpec((tm, tn), lambda i, j, kk: (i, j)),
            scratch_shapes=scratch_shapes,
        ),
        compiler_params=_compiler_params(("parallel", "parallel", "arbitrary"),
                                         footprint),
        cost_estimate=cost,
    )(a, w, bias2)
    if (mp, np_) != (m, n):
        out = out[:m, :n]
    return out


# --------------------------------------------------------------------------
# Kernel 3: fused LayerNorm prologue + GEMM (+ bias + activation).
#   The normalized tile is computed once per row-block (j == 0) into a VMEM
#   scratch and reused for every N-tile; N axis is therefore "arbitrary".
# --------------------------------------------------------------------------
def _prenorm_matmul_kernel(x_ref, g_ref, b_ref, w_ref, bias_ref, o_ref,
                           xn_ref, *, act):
    j = pl.program_id(1)

    @pl.when(j == 0)
    def _():
        x = x_ref[...].astype(jnp.float32)
        mean = jnp.mean(x, axis=-1, keepdims=True)
        xc = x - mean
        var = jnp.mean(xc * xc, axis=-1, keepdims=True)
        xn = xc * jax.lax.rsqrt(var + LN_EPS) * g_ref[...] + b_ref[...]
        xn_ref[...] = xn.astype(xn_ref.dtype)

    y = (jnp.dot(xn_ref[...], w_ref[...], preferred_element_type=jnp.float32)
         + bias_ref[...])
    if act == "gelu":
        y = _gelu(y)
    o_ref[...] = y.astype(o_ref.dtype)


def prenorm_matmul(x, gamma, beta, w, bias, *, act=None, out_dtype=jnp.bfloat16,
                   block_m=None, block_n=None):
    m, d = x.shape
    n = w.shape[1]
    if w.dtype != jnp.bfloat16:
        w = w.astype(jnp.bfloat16)
    if bias.dtype != jnp.float32:
        bias = bias.astype(jnp.float32)

    dbm, dbn, _ = _default_gemm_blocks()
    block_m = dbm if block_m is None else block_m
    block_n = dbn if block_n is None else block_n

    tm = min(block_m, _round_up(m, 16))      # 16: bf16-friendly min sublane tile
    tn = min(block_n, _round_up(n, 128))
    mp, np_ = _round_up(m, tm), _round_up(n, tn)
    if mp != m:
        x = jnp.pad(x, ((0, mp - m), (0, 0)))
    if np_ != n:
        w = jnp.pad(w, ((0, 0), (0, np_ - n)))
        bias = jnp.pad(bias, (0, np_ - n))
    bias2 = bias.reshape(1, np_)

    out_isz = jnp.dtype(out_dtype).itemsize
    footprint = (2 * tm * d * x.dtype.itemsize + tm * d * 2
                 + 2 * d * tn * 2 + 2 * tm * tn * out_isz + 4 * (2 * d + tn) * 4)
    cost = pl.CostEstimate(
        flops=2 * mp * d * np_,
        transcendentals=(mp * np_ if act == "gelu" else 0),
        bytes_accessed=(mp * d * x.dtype.itemsize + d * np_ * 2 + np_ * 4
                        + mp * np_ * out_isz),
    )
    out = pl.pallas_call(
        functools.partial(_prenorm_matmul_kernel, act=act),
        out_shape=jax.ShapeDtypeStruct((mp, np_), out_dtype),
        grid_spec=pltpu.PrefetchScalarGridSpec(
            num_scalar_prefetch=0,
            grid=(mp // tm, np_ // tn),
            in_specs=[
                pl.BlockSpec((tm, d), lambda i, j: (i, 0)),
                pl.BlockSpec((1, d), lambda i, j: (0, 0)),
                pl.BlockSpec((1, d), lambda i, j: (0, 0)),
                pl.BlockSpec((d, tn), lambda i, j: (0, j)),
                pl.BlockSpec((1, tn), lambda i, j: (0, j)),
            ],
            out_specs=pl.BlockSpec((tm, tn), lambda i, j: (i, j)),
            scratch_shapes=[pltpu.VMEM((tm, d), jnp.bfloat16)],
        ),
        # j must stay sequential: the normalized tile cached at j == 0 is reused
        # by every later j for the same i.
        compiler_params=_compiler_params(("parallel", "arbitrary"), footprint),
        cost_estimate=cost,
    )(x,
      gamma.astype(jnp.float32).reshape(1, d),
      beta.astype(jnp.float32).reshape(1, d),
      w, bias2)
    if (mp, np_) != (m, n):
        out = out[:m, :n]
    return out


# --------------------------------------------------------------------------
# Kernel 4: fully fused PreNorm FeedForward:  LN -> GEMM1 -> GELU -> GEMM2.
#   The (tm, hidden) activation stays in VMEM; it never round-trips HBM.
#   Only used when both weight matrices fit the per-core VMEM budget.
# --------------------------------------------------------------------------
def _prenorm_ffn_kernel(x_ref, g_ref, b_ref, w1_ref, b1_ref, w2_ref, b2_ref,
                        o_ref):
    x = x_ref[...].astype(jnp.float32)
    mean = jnp.mean(x, axis=-1, keepdims=True)
    xc = x - mean
    var = jnp.mean(xc * xc, axis=-1, keepdims=True)
    xn = (xc * jax.lax.rsqrt(var + LN_EPS) * g_ref[...] + b_ref[...]
          ).astype(jnp.bfloat16)
    h = jnp.dot(xn, w1_ref[...], preferred_element_type=jnp.float32) + b1_ref[...]
    h = _gelu(h).astype(jnp.bfloat16)
    y = jnp.dot(h, w2_ref[...], preferred_element_type=jnp.float32) + b2_ref[...]
    o_ref[...] = y.astype(o_ref.dtype)


def _ffn_fusion_plan(m, d, hidden, d_out, in_itemsize, out_itemsize):
    """Returns (tm, footprint) for the fused LN+FFN kernel, or None if the
    weights don't fit the per-core VMEM budget (fall back to two GEMMs)."""
    cap = _vmem_capacity_bytes()
    budget = min(cap // 3, 40 * 1024 * 1024)
    fixed = 2 * (d * hidden + hidden * d_out) * 2 + (hidden + d_out + 2 * d) * 4
    if fixed > budget // 2:
        return None
    per_row = (2 * d * in_itemsize + d * 2 + hidden * 6 + d_out * 4
               + 2 * d_out * out_itemsize)
    tm = (budget - fixed) // per_row
    tm = min(tm, 1024)
    tm = (tm // 16) * 16
    if tm < 16:
        return None
    tm = min(tm, _round_up(m, 16))
    return tm, fixed + per_row * tm


def prenorm_ffn(x2, gamma, beta, w1, b1, w2, b2, *, out_dtype=jnp.bfloat16):
    m, d = x2.shape
    hidden = w1.shape[1]
    d_out = w2.shape[1]
    if w1.dtype != jnp.bfloat16:
        w1 = w1.astype(jnp.bfloat16)
    if w2.dtype != jnp.bfloat16:
        w2 = w2.astype(jnp.bfloat16)
    b1 = b1.astype(jnp.float32)
    b2 = b2.astype(jnp.float32)

    out_isz = jnp.dtype(out_dtype).itemsize
    plan = _ffn_fusion_plan(m, d, hidden, d_out, x2.dtype.itemsize, out_isz)
    if plan is None:
        return None
    tm, footprint = plan

    mp = _round_up(m, tm)
    if mp != m:
        x2 = jnp.pad(x2, ((0, mp - m), (0, 0)))

    cost = pl.CostEstimate(
        flops=2 * mp * d * hidden + 2 * mp * hidden * d_out,
        transcendentals=mp * hidden,
        bytes_accessed=(mp * d * x2.dtype.itemsize
                        + (d * hidden + hidden * d_out) * 2
                        + (hidden + d_out + 2 * d) * 4
                        + mp * d_out * out_isz),
    )
    out = pl.pallas_call(
        _prenorm_ffn_kernel,
        out_shape=jax.ShapeDtypeStruct((mp, d_out), out_dtype),
        grid_spec=pltpu.PrefetchScalarGridSpec(
            num_scalar_prefetch=0,
            grid=(mp // tm,),
            in_specs=[
                pl.BlockSpec((tm, d), lambda i: (i, 0)),
                pl.BlockSpec((1, d), lambda i: (0, 0)),
                pl.BlockSpec((1, d), lambda i: (0, 0)),
                pl.BlockSpec((d, hidden), lambda i: (0, 0)),
                pl.BlockSpec((1, hidden), lambda i: (0, 0)),
                pl.BlockSpec((hidden, d_out), lambda i: (0, 0)),
                pl.BlockSpec((1, d_out), lambda i: (0, 0)),
            ],
            out_specs=pl.BlockSpec((tm, d_out), lambda i: (i, 0)),
        ),
        compiler_params=_compiler_params(("parallel",), footprint),
        cost_estimate=cost,
    )(x2,
      gamma.astype(jnp.float32).reshape(1, d),
      beta.astype(jnp.float32).reshape(1, d),
      w1, b1.reshape(1, hidden), w2, b2.reshape(1, d_out))
    if mp != m:
        out = out[:m]
    return out


# --------------------------------------------------------------------------
# Modules
# --------------------------------------------------------------------------
class FeedForward:
    """Linear(dim->hidden) + GELU + Linear(hidden->dim) on Pallas GEMM kernels.
    This is the `fn` wrapped by PreNorm in MSCANet's transformer block."""

    def __init__(self, dim, hidden_dim, key, out_dtype=jnp.bfloat16):
        k1, k2, k3, k4 = jax.random.split(key, 4)
        lim1 = 1.0 / math.sqrt(dim)
        lim2 = 1.0 / math.sqrt(hidden_dim)
        w1 = jax.random.uniform(k1, (dim, hidden_dim), jnp.float32, -lim1, lim1)
        b1 = jax.random.uniform(k2, (hidden_dim,), jnp.float32, -lim1, lim1)
        w2 = jax.random.uniform(k3, (hidden_dim, dim), jnp.float32, -lim2, lim2)
        b2 = jax.random.uniform(k4, (dim,), jnp.float32, -lim2, lim2)
        self.dim, self.hidden, self.out_dtype = dim, hidden_dim, out_dtype
        # Pre-cast weights ONCE (no per-call weight-sized astype HBM copies).
        # TODO(synk): also pre-pad weights at init when dim/hidden are not
        # multiples of 128 (typical transformer dims already are).
        self.w1 = w1.astype(jnp.bfloat16)
        self.b1 = b1.astype(jnp.float32)
        self.w2 = w2.astype(jnp.bfloat16)
        self.b2 = b2.astype(jnp.float32)
        # f32 copies kept only for the pure-JAX reference in the demo
        self.w1_f32, self.b1_f32, self.w2_f32, self.b2_f32 = w1, b1, w2, b2

    def __call__(self, x):
        lead, d = x.shape[:-1], x.shape[-1]
        h = matmul_bias_act(x.reshape(-1, d), self.w1, self.b1,
                            act="gelu", out_dtype=jnp.bfloat16)
        y = matmul_bias_act(h, self.w2, self.b2, act=None,
                            out_dtype=self.out_dtype)
        return y.reshape(*lead, y.shape[-1])

    def call_with_prenorm(self, x, gamma, beta, *, allow_full_fusion=True):
        """LayerNorm fused into fn; hidden activation stays in VMEM when the
        fully fused LN+FFN kernel fits, otherwise two fused GEMM kernels."""
        lead, d = x.shape[:-1], x.shape[-1]
        x2 = x.reshape(-1, d)
        if allow_full_fusion:
            y = prenorm_ffn(x2, gamma, beta, self.w1, self.b1, self.w2, self.b2,
                            out_dtype=self.out_dtype)
            if y is not None:
                return y.reshape(*lead, y.shape[-1])
        h = prenorm_matmul(x2, gamma, beta, self.w1, self.b1,
                           act="gelu", out_dtype=jnp.bfloat16)
        y = matmul_bias_act(h, self.w2, self.b2, act=None,
                            out_dtype=self.out_dtype)
        return y.reshape(*lead, y.shape[-1])


class PreNorm:
    """forward(x, **kwargs) = fn(LayerNorm(dim)(x), **kwargs)."""

    def __init__(self, dim, fn):
        self.dim = dim
        # nn.LayerNorm default init: weight = 1, bias = 0
        self.gamma = jnp.ones((dim,), jnp.float32)
        self.beta = jnp.zeros((dim,), jnp.float32)
        self.fn = fn

    def __call__(self, x, **kwargs):
        fused_ok = (hasattr(self.fn, "call_with_prenorm")
                    and not kwargs and self.dim % 128 == 0)
        if fused_ok:
            return self.fn.call_with_prenorm(x, self.gamma, self.beta)
        # Generic path for arbitrary fn: standalone Pallas LayerNorm.
        return self.fn(layer_norm(x, self.gamma, self.beta,
                                  out_dtype=jnp.bfloat16), **kwargs)


# --------------------------------------------------------------------------
# Pure-JAX reference with matching numerics (bf16 operands, f32 accumulation)
# --------------------------------------------------------------------------
def prenorm_ff_ref(x, gamma, beta, w1, b1, w2, b2):
    xf = x.astype(jnp.float32)
    mean = jnp.mean(xf, -1, keepdims=True)
    var = jnp.mean((xf - mean) ** 2, -1, keepdims=True)
    xn = ((xf - mean) * jax.lax.rsqrt(var + LN_EPS) * gamma + beta)
    xn = xn.astype(jnp.bfloat16)
    lead, d = x.shape[:-1], x.shape[-1]
    h = jnp.dot(xn.reshape(-1, d), w1.astype(jnp.bfloat16),
                preferred_element_type=jnp.float32) + b1
    h = _gelu(h).astype(jnp.bfloat16)
    y = jnp.dot(h, w2.astype(jnp.bfloat16),
                preferred_element_type=jnp.float32) + b2
    return y.reshape(*lead, y.shape[-1])


# --------------------------------------------------------------------------
if __name__ == "__main__":
    B, S, DIM, HIDDEN = 2, 16, 128, 256
    key = jax.random.PRNGKey(0)
    kx, kff, kg, kb = jax.random.split(key, 4)
    x = jax.random.normal(kx, (B, S, DIM), jnp.float32)

    ff = FeedForward(DIM, HIDDEN, kff)
    block = PreNorm(DIM, ff)

    # 1) fully fused PreNorm+FFN path (note: at this tiny M the grid is (1,),
    #    so on v7x only one TensorCore is exercised — fine for a demo shape)
    fwd = jax.jit(lambda inp: block(inp))
    out = fwd(x)
    jax.block_until_ready(out)
    assert out.shape == (B, S, DIM)
    assert bool(jnp.isfinite(out.astype(jnp.float32)).all())

    ref = prenorm_ff_ref(x, block.gamma, block.beta, ff.w1_f32, ff.b1_f32,
                         ff.w2_f32, ff.b2_f32)
    assert bool(jnp.allclose(out.astype(jnp.float32), ref, rtol=2e-2, atol=2e-2))

    # 2) un-fused two-GEMM PreNorm path (prenorm_matmul + matmul_bias_act)
    out2 = jax.jit(lambda inp: ff.call_with_prenorm(
        inp, block.gamma, block.beta, allow_full_fusion=False))(x)
    jax.block_until_ready(out2)
    assert bool(jnp.allclose(out2.astype(jnp.float32), ref, rtol=2e-2, atol=2e-2))

    # 3) generic PreNorm path: standalone LayerNorm kernel -> fn
    out3 = jax.jit(lambda inp: ff(layer_norm(inp, block.gamma, block.beta,
                                             out_dtype=jnp.bfloat16)))(x)
    jax.block_until_ready(out3)
    assert bool(jnp.allclose(out3.astype(jnp.float32), ref, rtol=2e-2, atol=2e-2))

    # 4) standalone LayerNorm correctness with NON-trivial gamma/beta
    gamma = jax.random.normal(kg, (DIM,), jnp.float32)
    beta = jax.random.normal(kb, (DIM,), jnp.float32)
    ln = layer_norm(x, gamma, beta, out_dtype=jnp.float32)
    mean = jnp.mean(x, -1, keepdims=True)
    var = jnp.mean((x - mean) ** 2, -1, keepdims=True)
    ln_ref = (x - mean) * jax.lax.rsqrt(var + LN_EPS) * gamma + beta
    assert bool(jnp.allclose(ln, ln_ref, rtol=1e-3, atol=1e-3))

    # 5) f32-output GEMM path (accumulates directly into the output block,
    #    multiple K steps to exercise init/finalize via pl.when)
    a = jax.random.normal(jax.random.PRNGKey(1), (32, 384), jnp.float32)
    wt = jax.random.normal(jax.random.PRNGKey(2), (384, 256), jnp.float32) * 0.05
    bs = jax.random.normal(jax.random.PRNGKey(3), (256,), jnp.float32)
    y = matmul_bias_act(a, wt, bs, act=None, out_dtype=jnp.float32, block_k=128)
    y_ref = jnp.dot(a.astype(jnp.bfloat16), wt.astype(jnp.bfloat16),
                    preferred_element_type=jnp.float32) + bs
    assert bool(jnp.allclose(y, y_ref, rtol=2e-2, atol=2e-2))

    print("KERNEL_OK")
</pallas_src>

<mosaic_0001>
module attributes {stable_mosaic.version = 11 : i64} {
  func.func @_prenorm_ffn_kernel(%arg0: i32, %arg1: memref<32x128xf32, #tpu.memory_space<vmem>>, %arg2: memref<1x128xf32, #tpu.memory_space<vmem>>, %arg3: memref<1x128xf32, #tpu.memory_space<vmem>>, %arg4: memref<128x256xbf16, #tpu.memory_space<vmem>>, %arg5: memref<1x256xf32, #tpu.memory_space<vmem>>, %arg6: memref<256x128xbf16, #tpu.memory_space<vmem>>, %arg7: memref<1x128xf32, #tpu.memory_space<vmem>>, %arg8: memref<32x128xbf16, #tpu.memory_space<vmem>>) attributes {dimension_semantics = [#tpu.dimension_semantics<parallel>], iteration_bounds = array<i64: 1>, scalar_prefetch = 0 : i64, scratch_operands = 0 : i64, tpu.core_type = #tpu.core_type<tc>, window_params = [{transform_indices = @transform_0, window_bounds = array<i64: 32, 128>}, {pipeline_mode = #tpu.pipeline_mode<synchronous>, transform_indices = @transform_1, window_bounds = array<i64: 1, 128>}, {pipeline_mode = #tpu.pipeline_mode<synchronous>, transform_indices = @transform_2, window_bounds = array<i64: 1, 128>}, {pipeline_mode = #tpu.pipeline_mode<synchronous>, transform_indices = @transform_3, window_bounds = array<i64: 128, 256>}, {pipeline_mode = #tpu.pipeline_mode<synchronous>, transform_indices = @transform_4, window_bounds = array<i64: 1, 256>}, {pipeline_mode = #tpu.pipeline_mode<synchronous>, transform_indices = @transform_5, window_bounds = array<i64: 256, 128>}, {pipeline_mode = #tpu.pipeline_mode<synchronous>, transform_indices = @transform_6, window_bounds = array<i64: 1, 128>}, {transform_indices = @transform_7, window_bounds = array<i64: 32, 128>}]} {
    %c0 = arith.constant 0 : index
    %c0_0 = arith.constant 0 : index
    %0 = vector.load %arg1[%c0, %c0_0] : memref<32x128xf32, #tpu.memory_space<vmem>>, vector<32x128xf32>
    %cst = arith.constant dense<0.000000e+00> : vector<32xf32>
    %1 = vector.multi_reduction <add>, %0, %cst [1] : vector<32x128xf32> to vector<32xf32>
    %2 = vector.shape_cast %1 : vector<32xf32> to vector<32x1xf32>
    %cst_1 = arith.constant 1.280000e+02 : f32
    %3 = vector.broadcast %cst_1 : f32 to vector<32x1xf32>
    %4 = arith.divf %2, %3 : vector<32x1xf32>
    %5 = vector.broadcast %4 : vector<32x1xf32> to vector<32x128xf32>
    %6 = arith.subf %0, %5 : vector<32x128xf32>
    %7 = arith.mulf %6, %6 : vector<32x128xf32>
    %cst_2 = arith.constant dense<0.000000e+00> : vector<32xf32>
    %8 = vector.multi_reduction <add>, %7, %cst_2 [1] : vector<32x128xf32> to vector<32xf32>
    %9 = vector.shape_cast %8 : vector<32xf32> to vector<32x1xf32>
    %cst_3 = arith.constant 1.280000e+02 : f32
    %10 = vector.broadcast %cst_3 : f32 to vector<32x1xf32>
    %11 = arith.divf %9, %10 : vector<32x1xf32>
    %cst_4 = arith.constant 9.99999974E-6 : f32
    %12 = vector.broadcast %cst_4 : f32 to vector<32x1xf32>
    %13 = arith.addf %11, %12 : vector<32x1xf32>
    %14 = math.rsqrt %13 : vector<32x1xf32>
    %15 = vector.broadcast %14 : vector<32x1xf32> to vector<32x128xf32>
    %16 = arith.mulf %6, %15 : vector<32x128xf32>
    %c0_5 = arith.constant 0 : index
    %c0_6 = arith.constant 0 : index
    %17 = vector.load %arg2[%c0_5, %c0_6] : memref<1x128xf32, #tpu.memory_space<vmem>>, vector<1x128xf32>
    %18 = vector.broadcast %17 : vector<1x128xf32> to vector<32x128xf32>
    %19 = arith.mulf %16, %18 : vector<32x128xf32>
    %c0_7 = arith.constant 0 : index
    %c0_8 = arith.constant 0 : index
    %20 = vector.load %arg3[%c0_7, %c0_8] : memref<1x128xf32, #tpu.memory_space<vmem>>, vector<1x128xf32>
    %21 = vector.broadcast %20 : vector<1x128xf32> to vector<32x128xf32>
    %22 = arith.addf %19, %21 : vector<32x128xf32>
    %23 = arith.truncf %22 : vector<32x128xf32> to vector<32x128xbf16>
    %c0_9 = arith.constant 0 : index
    %c0_10 = arith.constant 0 : index
    %24 = vector.load %arg4[%c0_9, %c0_10] : memref<128x256xbf16, #tpu.memory_space<vmem>>, vector<128x256xbf16>
    %cst_11 = arith.constant dense<0.000000e+00> : vector<32x256xf32>
    %25 = tpu.matmul %23, %24, %cst_11 {dimension_numbers = #tpu.dot_dimension_numbers<[1], [0], [0], [1], [0, 0, 1, 1], [], []>} : vector<32x128xbf16>, vector<128x256xbf16>, vector<32x256xf32> -> vector<32x256xf32>
    %c0_12 = arith.constant 0 : index
    %c0_13 = arith.constant 0 : index
    %26 = vector.load %arg5[%c0_12, %c0_13] : memref<1x256xf32, #tpu.memory_space<vmem>>, vector<1x256xf32>
    %27 = vector.broadcast %26 : vector<1x256xf32> to vector<32x256xf32>
    %28 = arith.addf %25, %27 : vector<32x256xf32>
    %cst_14 = arith.constant 5.000000e-01 : f32
    %29 = vector.broadcast %cst_14 : f32 to vector<32x256xf32>
    %30 = arith.mulf %29, %28 : vector<32x256xf32>
    %cst_15 = arith.constant 4.471500e-02 : f32
    %31 = vector.broadcast %cst_15 : f32 to vector<32x256xf32>
    %32 = arith.mulf %31, %28 : vector<32x256xf32>
    %33 = arith.mulf %32, %28 : vector<32x256xf32>
    %34 = arith.mulf %33, %28 : vector<32x256xf32>
    %35 = arith.addf %28, %34 : vector<32x256xf32>
    %cst_16 = arith.constant 0.797884583 : f32
    %36 = vector.broadcast %cst_16 : f32 to vector<32x256xf32>
    %37 = arith.mulf %36, %35 : vector<32x256xf32>
    %38 = math.tanh %37 : vector<32x256xf32>
    %cst_17 = arith.constant 1.000000e+00 : f32
    %39 = vector.broadcast %cst_17 : f32 to vector<32x256xf32>
    %40 = arith.addf %39, %38 : vector<32x256xf32>
    %41 = arith.mulf %30, %40 : vector<32x256xf32>
    %42 = arith.truncf %41 : vector<32x256xf32> to vector<32x256xbf16>
    %c0_18 = arith.constant 0 : index
    %c0_19 = arith.constant 0 : index
    %43 = vector.load %arg6[%c0_18, %c0_19] : memref<256x128xbf16, #tpu.memory_space<vmem>>, vector<256x128xbf16>
    %cst_20 = arith.constant dense<0.000000e+00> : vector<32x128xf32>
    %44 = tpu.matmul %42, %43, %cst_20 {dimension_numbers = #tpu.dot_dimension_numbers<[1], [0], [0], [1], [0, 0, 1, 1], [], []>} : vector<32x256xbf16>, vector<256x128xbf16>, vector<32x128xf32> -> vector<32x128xf32>
    %c0_21 = arith.constant 0 : index
    %c0_22 = arith.constant 0 : index
    %45 = vector.load %arg7[%c0_21, %c0_22] : memref<1x128xf32, #tpu.memory_space<vmem>>, vector<1x128xf32>
    %46 = vector.broadcast %45 : vector<1x128xf32> to vector<32x128xf32>
    %47 = arith.addf %44, %46 : vector<32x128xf32>
    %48 = arith.truncf %47 : vector<32x128xf32> to vector<32x128xbf16>
    %c0_23 = arith.constant 0 : index
    %c0_24 = arith.constant 0 : index
    %49 = vector.load %arg8[%c0_23, %c0_24] : memref<32x128xbf16, #tpu.memory_space<vmem>>, vector<32x128xbf16>
    tpu.vector_store %arg8[%c0_23, %c0_24], %48 {strides = array<i32>} : memref<32x128xbf16, #tpu.memory_space<vmem>>, vector<32x128xbf16>,
    return
  }
  func.func @transform_0(%arg0: i32) -> (i32, i32) {
    %c0_i32 = arith.constant 0 : i32
    %c0_i32_0 = arith.constant 0 : i32
    return %arg0, %c0_i32 : i32, i32
  }
  func.func @transform_1(%arg0: i32) -> (i32, i32) {
    %c0_i32 = arith.constant 0 : i32
    %c0_i32_0 = arith.constant 0 : i32
    %c0_i32_1 = arith.constant 0 : i32
    return %c0_i32, %c0_i32_0 : i32, i32
  }
  func.func @transform_2(%arg0: i32) -> (i32, i32) {
    %c0_i32 = arith.constant 0 : i32
    %c0_i32_0 = arith.constant 0 : i32
    %c0_i32_1 = arith.constant 0 : i32
    return %c0_i32, %c0_i32_0 : i32, i32
  }
  func.func @transform_3(%arg0: i32) -> (i32, i32) {
    %c0_i32 = arith.constant 0 : i32
    %c0_i32_0 = arith.constant 0 : i32
    %c0_i32_1 = arith.constant 0 : i32
    return %c0_i32, %c0_i32_0 : i32, i32
  }
  func.func @transform_4(%arg0: i32) -> (i32, i32) {
    %c0_i32 = arith.constant 0 : i32
    %c0_i32_0 = arith.constant 0 : i32
    %c0_i32_1 = arith.constant 0 : i32
    return %c0_i32, %c0_i32_0 : i32, i32
  }
  func.func @transform_5(%arg0: i32) -> (i32, i32) {
    %c0_i32 = arith.constant 0 : i32
    %c0_i32_0 = arith.constant 0 : i32
    %c0_i32_1 = arith.constant 0 : i32
    return %c0_i32, %c0_i32_0 : i32, i32
  }
  func.func @transform_6(%arg0: i32) -> (i32, i32) {
    %c0_i32 = arith.constant 0 : i32
    %c0_i32_0 = arith.constant 0 : i32
    %c0_i32_1 = arith.constant 0 : i32
    return %c0_i32, %c0_i32_0 : i32, i32
  }
  func.func @transform_7(%arg0: i32) -> (i32, i32) {
    %c0_i32 = arith.constant 0 : i32
    %c0_i32_0 = arith.constant 0 : i32
    return %arg0, %c0_i32 : i32, i32
  }
}

</mosaic_0001>

<llo_original>
// kernel: _lambda_.1
$region0: #{_lambda_.1}
  #allocation0 [shape = 'u32[]', space=smem, size = 0x4, offset = 0x4, fixed_abs, tag = 'smem constant byte address 0x4 - core index']
  #allocation1 [shape = 'u32[72,128]{1,0:T(1,128)}', space=vmem, size = 0x9000, scoped, tag = 'internal scratch']
  %s0 = inlined_call_operand.hbm [shape: f32[32,128], index: 0, kind: input, shape index: {}]
  %s1 = inlined_call_operand.vmem [shape: f32[1,128], index: 1, kind: input, shape index: {}]
  %s2 = inlined_call_operand.vmem [shape: f32[1,128], index: 2, kind: input, shape index: {}]
  %s3 = inlined_call_operand.hbm [shape: bf16[128,256], index: 3, kind: input, shape index: {}]
  %s4 = inlined_call_operand.vmem [shape: f32[1,256], index: 4, kind: input, shape index: {}]
  %s5 = inlined_call_operand.hbm [shape: bf16[256,128], index: 5, kind: input, shape index: {}]
  %s6 = inlined_call_operand.vmem [shape: f32[1,128], index: 6, kind: input, shape index: {}]
  %s7 = inlined_call_operand.hbm [shape: bf16[32,128], index: 7, kind: output, shape index: {}]
  %s8 = sld [smem:[#allocation0]]
  $region50: #{_lambda_.1} parent=0
    _
  %s10 = ssub.s32 1, %s8
  %s11 = scalar_select 0, %s10, %s8
  $region1: #{_lambda_.1} parent=0
    #allocation2 [shape = 'u8[16384]{0}', space=vmem, size = 0x4000, scoped, tag = 'input window, operand 0, single buffered']
    #allocation3 [shape = 's32[1]{0}', space=sflag, size = 0x4, scoped, tag = 'scoped memory for _lambda_.1']
    #allocation4 [shape = 's32[1]{0}', space=sflag, size = 0x4, scoped, tag = 'scoped memory for _lambda_.1']
    #allocation5 [shape = 'u8[65536]{0}', space=vmem, size = 0x10000, scoped, tag = 'input window, operand 3, single buffered']
    #allocation6 [shape = 's32[1]{0}', space=sflag, size = 0x4, scoped, tag = 'scoped memory for _lambda_.1']
    #allocation7 [shape = 'u8[65536]{0}', space=vmem, size = 0x10000, scoped, tag = 'input window, operand 5, single buffered']
    #allocation8 [shape = 'u8[8192]{0}', space=vmem, size = 0x2000, scoped, tag = 'output window, operand 0, single buffered']
    %12 = vsyncpa [#allocation3], 0
    %13 = vsyncpa [#allocation6], 0
    %14 = vsyncpa [#allocation4], 0
    // Predicated region
    $region2: #{_lambda_.1} parent=1 // pred_check
      _
    $region3: #{_lambda_.1} parent=1 // pred_check_branch
      %16 = sbr.rel (0) target = $region5
    $region4: #{_lambda_.1} parent=1 // pred_region
      %18 = vsyncadd [#allocation3], 0
      %s19 = sshll.u32 %s0, 4
      %s20 = int_to_ptr.hbm [resolvable:$true] %s19
      %s21 = sshll.u32 [#allocation2], 4
      %s22 = int_to_ptr.vmem [resolvable:$true] %s21
      %27 = dma.hbm_to_vmem [thread:$0]  %s20, 512, %s22, [#allocation3], 128, 128, 8
    $region5: #{_lambda_.1} parent=1 // pred_fallthru
      _
    // Predicated region
    $region6: #{_lambda_.1} parent=1 // pred_check
      _
    $region7: #{_lambda_.1} parent=1 // pred_check_branch
      %29 = sbr.rel (0) target = $region9
    $region8: #{_lambda_.1} parent=1 // pred_region
      _
    $region9: #{_lambda_.1} parent=1 // pred_fallthru
      _
    // Predicated region
    $region10: #{_lambda_.1} parent=1 // pred_check
      _
    $region11: #{_lambda_.1} parent=1 // pred_check_branch
      %31 = sbr.rel (0) target = $region13
    $region12: #{_lambda_.1} parent=1 // pred_region
      _
    $region13: #{_lambda_.1} parent=1 // pred_fallthru
      _
    // Predicated region
    $region14: #{_lambda_.1} parent=1 // pred_check
      _
    $region15: #{_lambda_.1} parent=1 // pred_check_branch
      %33 = sbr.rel (0) target = $region17
    $region16: #{_lambda_.1} parent=1 // pred_region
      %35 = vsyncadd [#allocation6], 0
      %s36 = sshll.u32 %s3, 4
      %s37 = int_to_ptr.hbm [resolvable:$true] %s36
      %s38 = sshll.u32 [#allocation5], 4
      %s39 = int_to_ptr.vmem [resolvable:$true] %s38
      %44 = dma.hbm_to_vmem [thread:$0]  %s37, 2048, %s39, [#allocation6], 128, 128, 8
    $region17: #{_lambda_.1} parent=1 // pred_fallthru
      _
    // Predicated region
    $region18: #{_lambda_.1} parent=1 // pred_check
      _
    $region19: #{_lambda_.1} parent=1 // pred_check_branch
      %46 = sbr.rel (0) target = $region21
    $region20: #{_lambda_.1} parent=1 // pred_region
      _
    $region21: #{_lambda_.1} parent=1 // pred_fallthru
      _
    // Predicated region
    $region22: #{_lambda_.1} parent=1 // pred_check
      _
    $region23: #{_lambda_.1} parent=1 // pred_check_branch
      %48 = sbr.rel (0) target = $region25
    $region24: #{_lambda_.1} parent=1 // pred_region
      %50 = vsyncadd [#allocation6], 0
      %s51 = sshll.u32 %s5, 4
      %s52 = int_to_ptr.hbm [resolvable:$true] %s51
      %s53 = sshll.u32 [#allocation7], 4
      %s54 = int_to_ptr.vmem [resolvable:$true] %s53
      %59 = dma.hbm_to_vmem [thread:$0]  %s52, 2048, %s54, [#allocation6], 64, 64, 4
    $region25: #{_lambda_.1} parent=1 // pred_fallthru
      _
    // Predicated region
    $region26: #{_lambda_.1} parent=1 // pred_check
      _
    $region27: #{_lambda_.1} parent=1 // pred_check_branch
      %61 = sbr.rel (0) target = $region29
    $region28: #{_lambda_.1} parent=1 // pred_region
      _
    $region29: #{_lambda_.1} parent=1 // pred_fallthru
      _
    // Predicated region
    $region30: #{_lambda_.1} parent=1 // pred_check
      _
    $region31: #{_lambda_.1} parent=1 // pred_check_branch
      %63 = sbr.rel (0) target = $region33
    $region32: #{_lambda_.1} parent=1 // pred_region
      %65 = dma.done [#allocation3], 512
    $region33: #{_lambda_.1} parent=1 // pred_fallthru
      _
    // Predicated region
    $region34: #{_lambda_.1} parent=1 // pred_check
      _
    $region35: #{_lambda_.1} parent=1 // pred_check_branch
      %67 = sbr.rel (0) target = $region37
    $region36: #{_lambda_.1} parent=1 // pred_region
      %69 = dma.done [#allocation6], 2048
    $region37: #{_lambda_.1} parent=1 // pred_fallthru
      _
    // Predicated region
    $region38: #{_lambda_.1} parent=1 // pred_check
      _
    $region39: #{_lambda_.1} parent=1 // pred_check_branch
      %71 = sbr.rel (0) target = $region41
    $region40: #{_lambda_.1} parent=1 // pred_region
      %73 = dma.done [#allocation6], 2048
    $region41: #{_lambda_.1} parent=1 // pred_fallthru
      _
    %v74 = vld [vmem:[#allocation2] sm:$0xff]
    %v75 = vld [vmem:[#allocation2 + $0x8] sm:$0xff]
    %v76 = vld [vmem:[#allocation2 + $0x10] sm:$0xff]
    %v77 = vld [vmem:[#allocation2 + $0x18] sm:$0xff]
    %78 = vadd.xlane.f32.xlu0 %v74
    %v79 = vpop.xlane.xlu0 %78
    %80 = vadd.xlane.f32.xlu0 %v75
    %v81 = vpop.xlane.xlu0 %80
    %82 = vadd.xlane.f32.xlu0 %v76
    %v83 = vpop.xlane.xlu0 %82
    %84 = vadd.xlane.f32.xlu0 %v77
    %v85 = vpop.xlane.xlu0 %84
    %v86 = vrcp.pop 128.0
    %v87 = vmul.f32 128.0, %v86
    %v88 = vsub.f32 1.0, %v87
    %v89 = vmul.f32 %v86, %v88
    %v90 = vadd.f32 %v86, %v89
    %vm91 = vweird.f32 %v86
    %v92 = vsel %vm91, %v86, %v90
    %v93 = vmul.f32 %v79, %v92
    %v94 = vmul.f32 %v81, %v92
    %v95 = vmul.f32 %v83, %v92
    %v96 = vmul.f32 %v85, %v92
    %v97 = vsub.f32 %v74, %v93
    %v98 = vsub.f32 %v75, %v94
    %v99 = vsub.f32 %v76, %v95
    %v100 = vsub.f32 %v77, %v96
    %v101 = vmul.f32 %v97, %v97
    %v102 = vmul.f32 %v98, %v98
    %v103 = vmul.f32 %v99, %v99
    %v104 = vmul.f32 %v100, %v100
    %105 = vadd.xlane.f32.xlu0 %v101
    %v106 = vpop.xlane.xlu0 %105
    %107 = vadd.xlane.f32.xlu0 %v102
    %v108 = vpop.xlane.xlu0 %107
    %109 = vadd.xlane.f32.xlu0 %v103
    %v110 = vpop.xlane.xlu0 %109
    %111 = vadd.xlane.f32.xlu0 %v104
    %v112 = vpop.xlane.xlu0 %111
    %v113 = vmul.f32 %v106, %v92
    %v114 = vmul.f32 %v108, %v92
    %v115 = vmul.f32 %v110, %v92
    %v116 = vmul.f32 %v112, %v92
    %v117 = vadd.f32 %v113, 1e-05
    %v118 = vadd.f32 %v114, 1e-05
    %v119 = vadd.f32 %v115, 1e-05
    %v120 = vadd.f32 %v116, 1e-05
    %v121 = vrsqrt.pop %v117
    %v122 = vmul.f32 %v121, %v117
    %v123 = vmul.f32 %v122, %v121
    %v124 = vmul.f32 0.5, %v123
    %v125 = vsub.f32 1.5, %v124
    %v126 = vmul.f32 %v121, %v125
    %vm127 = vweird.f32 %v117
    %vm128 = vweird.f32 %v121
    %vm129 = vmor %vm127, %vm128
    %v130 = vsel %vm129, %v121, %v126
    %v131 = vrsqrt.pop %v118
    %v132 = vmul.f32 %v131, %v118
    %v133 = vmul.f32 %v132, %v131
    %v134 = vmul.f32 0.5, %v133
    %v135 = vsub.f32 1.5, %v134
    %v136 = vmul.f32 %v131, %v135
    %vm137 = vweird.f32 %v118
    %vm138 = vweird.f32 %v131
    %vm139 = vmor %vm137, %vm138
    %v140 = vsel %vm139, %v131, %v136
    %v141 = vrsqrt.pop %v119
    %v142 = vmul.f32 %v141, %v119
    %v143 = vmul.f32 %v142, %v141
    %v144 = vmul.f32 0.5, %v143
    %v145 = vsub.f32 1.5, %v144
    %v146 = vmul.f32 %v141, %v145
    %vm147 = vweird.f32 %v119
    %vm148 = vweird.f32 %v141
    %vm149 = vmor %vm147, %vm148
    %v150 = vsel %vm149, %v141, %v146
    %v151 = vrsqrt.pop %v120
    %v152 = vmul.f32 %v151, %v120
    %v153 = vmul.f32 %v152, %v151
    %v154 = vmul.f32 0.5, %v153
    %v155 = vsub.f32 1.5, %v154
    %v156 = vmul.f32 %v151, %v155
    %vm157 = vweird.f32 %v120
    %vm158 = vweird.f32 %v151
    %vm159 = vmor %vm157, %vm158
    %v160 = vsel %vm159, %v151, %v156
    %v161 = vmul.f32 %v97, %v130
    %v162 = vmul.f32 %v98, %v140
    %v163 = vmul.f32 %v99, %v150
    %v164 = vmul.f32 %v100, %v160
    %v165 = vld [vmem:[%s1] sm:$0x1]
    %v167 = vperm.slane %v165, 0
    %v169 = vmul.f32 %v161, %v167
    %v170 = vmul.f32 %v162, %v167
    %v171 = vmul.f32 %v163, %v167
    %v172 = vmul.f32 %v164, %v167
    %v173 = vld [vmem:[%s2] sm:$0x1]
    %v175 = vperm.slane %v173, 0
    %v177 = vadd.f32 %v169, %v175
    %v178 = vadd.f32 %v170, %v175
    %v179 = vadd.f32 %v171, %v175
    %v180 = vadd.f32 %v172, %v175
    %v181 = vpack.c.bf16 %v178, %v177
    %v182 = vpack.c.bf16 %v180, %v179
    %v183 = vld [vmem:[#allocation5] sm:$0xff]
    %v184 = vld [vmem:[#allocation5 + $0x8] sm:$0xff]
    %v185 = vld [vmem:[#allocation5 + $0x10] sm:$0xff]
    %v186 = vld [vmem:[#allocation5 + $0x18] sm:$0xff]
    %v187 = vld [vmem:[#allocation5 + $0x20] sm:$0xff]
    %v188 = vld [vmem:[#allocation5 + $0x28] sm:$0xff]
    %v189 = vld [vmem:[#allocation5 + $0x30] sm:$0xff]
    %v190 = vld [vmem:[#allocation5 + $0x38] sm:$0xff]
    %v191 = vld [vmem:[#allocation5 + $0x40] sm:$0xff]
    %v192 = vld [vmem:[#allocation5 + $0x48] sm:$0xff]
    %v193 = vld [vmem:[#allocation5 + $0x50] sm:$0xff]
    %v194 = vld [vmem:[#allocation5 + $0x58] sm:$0xff]
    %v195 = vld [vmem:[#allocation5 + $0x60] sm:$0xff]
    %v196 = vld [vmem:[#allocation5 + $0x68] sm:$0xff]
    %v197 = vld [vmem:[#allocation5 + $0x70] sm:$0xff]
    %v198 = vld [vmem:[#allocation5 + $0x78] sm:$0xff]
    %v199 = vld [vmem:[%s4] sm:$0x3]
    %v201 = vperm.slane %v199, 0
    %v202 = vperm.slane %v199, 1
    %v221 = vunpack.c.l.b16 %v183
    %v222 = vunpack.c.h.b16 %v183
    %v223 = vunpack.c.l.b16 %v184
    %v224 = vunpack.c.h.b16 %v184
    %v225 = vunpack.c.l.b16 %v185
    %v226 = vunpack.c.h.b16 %v185
    %v227 = vunpack.c.l.b16 %v186
    %v228 = vunpack.c.h.b16 %v186
    %v229 = vunpack.c.l.b16 %v187
    %v230 = vunpack.c.h.b16 %v187
    %v231 = vunpack.c.l.b16 %v188
    %v232 = vunpack.c.h.b16 %v188
    %v233 = vunpack.c.l.b16 %v189
    %v234 = vunpack.c.h.b16 %v189
    %v235 = vunpack.c.l.b16 %v190
    %v236 = vunpack.c.h.b16 %v190
    %v237 = vunpack.c.l.b16 %v191
    %v238 = vunpack.c.h.b16 %v191
    %v239 = vunpack.c.l.b16 %v192
    %v240 = vunpack.c.h.b16 %v192
    %v241 = vunpack.c.l.b16 %v193
    %v242 = vunpack.c.h.b16 %v193
    %v243 = vunpack.c.l.b16 %v194
    %v244 = vunpack.c.h.b16 %v194
    %v245 = vunpack.c.l.b16 %v195
    %v246 = vunpack.c.h.b16 %v195
    %v247 = vunpack.c.l.b16 %v196
    %v248 = vunpack.c.h.b16 %v196
    %v249 = vunpack.c.l.b16 %v197
    %v250 = vunpack.c.h.b16 %v197
    %v251 = vunpack.c.l.b16 %v198
    %v252 = vunpack.c.h.b16 %v198
    %v253 = vpack.c.b16 %v223, %v221
    %v254 = vpack.c.b16 %v224, %v222
    %v255 = vpack.c.b16 %v227, %v225
    %v256 = vpack.c.b16 %v228, %v226
    %v257 = vpack.c.b16 %v231, %v229
    %v258 = vpack.c.b16 %v232, %v230
    %v259 = vpack.c.b16 %v235, %v233
    %v260 = vpack.c.b16 %v236, %v234
    %v261 = vpack.c.b16 %v239, %v237
    %v262 = vpack.c.b16 %v240, %v238
    %v263 = vpack.c.b16 %v243, %v241
    %v264 = vpack.c.b16 %v244, %v242
    %v265 = vpack.c.b16 %v247, %v245
    %v266 = vpack.c.b16 %v248, %v246
    %v267 = vpack.c.b16 %v251, %v249
    %v268 = vpack.c.b16 %v252, %v250
    %285 = vmatpush.bf16.msra.mxu0 %v267
    %286 = vmatpush.bf16.msra.mxu0 %v265
    %287 = vmatpush.bf16.msra.mxu0 %v263
    %288 = vmatpush.bf16.msra.mxu0 %v261
    %289 = vmatpush.bf16.msra.mxu0 %v259
    %290 = vmatpush.bf16.msra.mxu0 %v257
    %291 = vmatpush.bf16.msra.mxu0 %v255
    %292 = vmatpush.bf16.msra.mxu0 %v253
    %293 = vmatmul.bf16.gmra.mxu0 %v181
    %v294 = vpop.f32.mrf.mxu0
    %v295 = vadd.f32 %v201, %v294
    %v296 = vpop.f32.mrf.mxu0
    %v297 = vadd.f32 %v201, %v296
    %298 = vmatmul.bf16.gmra.mxu0 %v182
    %v299 = vpop.f32.mrf.mxu0
    %v300 = vadd.f32 %v201, %v299
    %v301 = vpop.f32.mrf.mxu0
    %v302 = vadd.f32 %v201, %v301
    %303 = vdwg.mxu0
    %304 = vmatpush.bf16.msra.mxu0 %v268
    %305 = vmatpush.bf16.msra.mxu0 %v266
    %306 = vmatpush.bf16.msra.mxu0 %v264
    %307 = vmatpush.bf16.msra.mxu0 %v262
    %308 = vmatpush.bf16.msra.mxu0 %v260
    %309 = vmatpush.bf16.msra.mxu0 %v258
    %310 = vmatpush.bf16.msra.mxu0 %v256
    %311 = vmatpush.bf16.msra.mxu0 %v254
    %312 = vmatmul.bf16.gmra.mxu0 %v181
    %v313 = vpop.f32.mrf.mxu0
    %v314 = vadd.f32 %v202, %v313
    %v315 = vpop.f32.mrf.mxu0
    %v316 = vadd.f32 %v202, %v315
    %317 = vmatmul.bf16.gmra.mxu0 %v182
    %v318 = vpop.f32.mrf.mxu0
    %v319 = vadd.f32 %v202, %v318
    %v320 = vpop.f32.mrf.mxu0
    %v321 = vadd.f32 %v202, %v320
    %322 = vdwg.mxu0
    %v323 = vmul.f32 %v295, 0.5
    %v324 = vmul.f32 %v314, 0.5
    %v325 = vmul.f32 %v297, 0.5
    %v326 = vmul.f32 %v316, 0.5
    %v327 = vmul.f32 %v300, 0.5
    %v328 = vmul.f32 %v319, 0.5
    %v329 = vmul.f32 %v302, 0.5
    %v330 = vmul.f32 %v321, 0.5
    %v331 = vmul.f32 %v295, 0.044715
    %v332 = vmul.f32 %v314, 0.044715
    %v333 = vmul.f32 %v297, 0.044715
    %v334 = vmul.f32 %v316, 0.044715
    %v335 = vmul.f32 %v300, 0.044715
    %v336 = vmul.f32 %v319, 0.044715
    %v337 = vmul.f32 %v302, 0.044715
    %v338 = vmul.f32 %v321, 0.044715
    %v339 = vmul.f32 %v331, %v295
    %v340 = vmul.f32 %v332, %v314
    %v341 = vmul.f32 %v333, %v297
    %v342 = vmul.f32 %v334, %v316
    %v343 = vmul.f32 %v335, %v300
    %v344 = vmul.f32 %v336, %v319
    %v345 = vmul.f32 %v337, %v302
    %v346 = vmul.f32 %v338, %v321
    %v347 = vmul.f32 %v339, %v295
    %v348 = vmul.f32 %v340, %v314
    %v349 = vmul.f32 %v341, %v297
    %v350 = vmul.f32 %v342, %v316
    %v351 = vmul.f32 %v343, %v300
    %v352 = vmul.f32 %v344, %v319
    %v353 = vmul.f32 %v345, %v302
    %v354 = vmul.f32 %v346, %v321
    %v355 = vadd.f32 %v295, %v347
    %v356 = vadd.f32 %v314, %v348
    %v357 = vadd.f32 %v297, %v349
    %v358 = vadd.f32 %v316, %v350
    %v359 = vadd.f32 %v300, %v351
    %v360 = vadd.f32 %v319, %v352
    %v361 = vadd.f32 %v302, %v353
    %v362 = vadd.f32 %v321, %v354
    %v363 = vmul.f32 %v355, 0.7978846
    %v364 = vmul.f32 %v356, 0.7978846
    %v365 = vmul.f32 %v357, 0.7978846
    %v366 = vmul.f32 %v358, 0.7978846
    %v367 = vmul.f32 %v359, 0.7978846
    %v368 = vmul.f32 %v360, 0.7978846
    %v369 = vmul.f32 %v361, 0.7978846
    %v370 = vmul.f32 %v362, 0.7978846
    %v371 = vtanh.pop %v363
    %v372 = vtanh.pop %v364
    %v373 = vtanh.pop %v365
    %v374 = vtanh.pop %v366
    %v375 = vtanh.pop %v367
    %v376 = vtanh.pop %v368
    %v377 = vtanh.pop %v369
    %v378 = vtanh.pop %v370
    %v379 = vadd.f32 %v371, 1.0
    %v380 = vadd.f32 %v372, 1.0
    %v381 = vadd.f32 %v373, 1.0
    %v382 = vadd.f32 %v374, 1.0
    %v383 = vadd.f32 %v375, 1.0
    %v384 = vadd.f32 %v376, 1.0
    %v385 = vadd.f32 %v377, 1.0
    %v386 = vadd.f32 %v378, 1.0
    %v387 = vmul.f32 %v323, %v379
    %v388 = vmul.f32 %v324, %v380
    %v389 = vmul.f32 %v325, %v381
    %v390 = vmul.f32 %v326, %v382
    %v391 = vmul.f32 %v327, %v383
    %v392 = vmul.f32 %v328, %v384
    %v393 = vmul.f32 %v329, %v385
    %v394 = vmul.f32 %v330, %v386
    %v395 = vpack.c.bf16 %v389, %v387
    %v396 = vpack.c.bf16 %v390, %v388
    %v397 = vpack.c.bf16 %v393, %v391
    %v398 = vpack.c.bf16 %v394, %v392
    %v399 = vld [vmem:[#allocation7] sm:$0xf]
    %v400 = vld [vmem:[#allocation7 + $0x4] sm:$0xf]
    %v401 = vld [vmem:[#allocation7 + $0x8] sm:$0xf]
    %v402 = vld [vmem:[#allocation7 + $0xc] sm:$0xf]
    %v403 = vld [vmem:[#allocation7 + $0x10] sm:$0xf]
    %v404 = vld [vmem:[#allocation7 + $0x14] sm:$0xf]
    %v405 = vld [vmem:[#allocation7 + $0x18] sm:$0xf]
    %v406 = vld [vmem:[#allocation7 + $0x1c] sm:$0xf]
    %v407 = vld [vmem:[#allocation7 + $0x20] sm:$0xf]
    %v408 = vld [vmem:[#allocation7 + $0x24] sm:$0xf]
    %v409 = vld [vmem:[#allocation7 + $0x28] sm:$0xf]
    %v410 = vld [vmem:[#allocation7 + $0x2c] sm:$0xf]
    %v411 = vld [vmem:[#allocation7 + $0x30] sm:$0xf]
    %v412 = vld [vmem:[#allocation7 + $0x34] sm:$0xf]
    %v413 = vld [vmem:[#allocation7 + $0x38] sm:$0xf]
    %v414 = vld [vmem:[#allocation7 + $0x3c] sm:$0xf]
    %v415 = vld [vmem:[#allocation7 + $0x40] sm:$0xf]
    %v416 = vld [vmem:[#allocation7 + $0x44] sm:$0xf]
    %v417 = vld [vmem:[#allocation7 + $0x48] sm:$0xf]
    %v418 = vld [vmem:[#allocation7 + $0x4c] sm:$0xf]
    %v419 = vld [vmem:[#allocation7 + $0x50] sm:$0xf]
    %v420 = vld [vmem:[#allocation7 + $0x54] sm:$0xf]
    %v421 = vld [vmem:[#allocation7 + $0x58] sm:$0xf]
    %v422 = vld [vmem:[#allocation7 + $0x5c] sm:$0xf]
    %v423 = vld [vmem:[#allocation7 + $0x60] sm:$0xf]
    %v424 = vld [vmem:[#allocation7 + $0x64] sm:$0xf]
    %v425 = vld [vmem:[#allocation7 + $0x68] sm:$0xf]
    %v426 = vld [vmem:[#allocation7 + $0x6c] sm:$0xf]
    %v427 = vld [vmem:[#allocation7 + $0x70] sm:$0xf]
    %v428 = vld [vmem:[#allocation7 + $0x74] sm:$0xf]
    %v429 = vld [vmem:[#allocation7 + $0x78] sm:$0xf]
    %v430 = vld [vmem:[#allocation7 + $0x7c] sm:$0xf]
    %v431 = vld [vmem:[%s6] sm:$0x1]
    %v433 = vperm.slane %v431, 0
    %v467 = vunpack.c.l.b16 %v399
    %v468 = vunpack.c.l.b16 %v400
    %v469 = vunpack.c.l.b16 %v401
    %v470 = vunpack.c.l.b16 %v402
    %v471 = vunpack.c.l.b16 %v403
    %v472 = vunpack.c.l.b16 %v404
    %v473 = vunpack.c.l.b16 %v405
    %v474 = vunpack.c.l.b16 %v406
    %v475 = vunpack.c.l.b16 %v407
    %v476 = vunpack.c.l.b16 %v408
    %v477 = vunpack.c.l.b16 %v409
    %v478 = vunpack.c.l.b16 %v410
    %v479 = vunpack.c.l.b16 %v411
    %v480 = vunpack.c.l.b16 %v412
    %v481 = vunpack.c.l.b16 %v413
    %v482 = vunpack.c.l.b16 %v414
    %v483 = vunpack.c.l.b16 %v415
    %v484 = vunpack.c.l.b16 %v416
    %v485 = vunpack.c.l.b16 %v417
    %v486 = vunpack.c.l.b16 %v418
    %v487 = vunpack.c.l.b16 %v419
    %v488 = vunpack.c.l.b16 %v420
    %v489 = vunpack.c.l.b16 %v421
    %v490 = vunpack.c.l.b16 %v422
    %v491 = vunpack.c.l.b16 %v423
    %v492 = vunpack.c.l.b16 %v424
    %v493 = vunpack.c.l.b16 %v425
    %v494 = vunpack.c.l.b16 %v426
    %v495 = vunpack.c.l.b16 %v427
    %v496 = vunpack.c.l.b16 %v428
    %v497 = vunpack.c.l.b16 %v429
    %v498 = vunpack.c.l.b16 %v430
    %v499 = vpack.c.b16 %v468, %v467
    %v500 = vpack.c.b16 %v470, %v469
    %v501 = vpack.c.b16 %v472, %v471
    %v502 = vpack.c.b16 %v474, %v473
    %v503 = vpack.c.b16 %v476, %v475
    %v504 = vpack.c.b16 %v478, %v477
    %v505 = vpack.c.b16 %v480, %v479
    %v506 = vpack.c.b16 %v482, %v481
    %v507 = vpack.c.b16 %v484, %v483
    %v508 = vpack.c.b16 %v486, %v485
    %v509 = vpack.c.b16 %v488, %v487
    %v510 = vpack.c.b16 %v490, %v489
    %v511 = vpack.c.b16 %v492, %v491
    %v512 = vpack.c.b16 %v494, %v493
    %v513 = vpack.c.b16 %v496, %v495
    %v514 = vpack.c.b16 %v498, %v497
    %531 = vmatpush.bf16.msra.mxu0 %v506
    %532 = vmatpush.bf16.msra.mxu0 %v505
    %533 = vmatpush.bf16.msra.mxu0 %v504
    %534 = vmatpush.bf16.msra.mxu0 %v503
    %535 = vmatpush.bf16.msra.mxu0 %v502
    %536 = vmatpush.bf16.msra.mxu0 %v501
    %537 = vmatpush.bf16.msra.mxu0 %v500
    %538 = vmatpush.bf16.msra.mxu0 %v499
    %539 = vmatmul.bf16.gmra.mxu0 %v395
    %v540 = vpop.f32.mrf.mxu0
    %v541 = vadd.f32 %v433, %v540
    %v542 = vpop.f32.mrf.mxu0
    %v543 = vadd.f32 %v433, %v542
    %544 = vmatmul.bf16.gmra.mxu0 %v397
    %v545 = vpop.f32.mrf.mxu0
    %v546 = vadd.f32 %v433, %v545
    %v547 = vpop.f32.mrf.mxu0
    %v548 = vadd.f32 %v433, %v547
    %549 = vdwg.mxu0
    %550 = vmatpush.bf16.msra.mxu0 %v514
    %551 = vmatpush.bf16.msra.mxu0 %v513
    %552 = vmatpush.bf16.msra.mxu0 %v512
    %553 = vmatpush.bf16.msra.mxu0 %v511
    %554 = vmatpush.bf16.msra.mxu0 %v510
    %555 = vmatpush.bf16.msra.mxu0 %v509
    %556 = vmatpush.bf16.msra.mxu0 %v508
    %557 = vmatpush.bf16.msra.mxu0 %v507
    %558 = vmatmul.bf16.gmra.mxu0 %v396
    %v559 = vpop.f32.mrf.mxu0
    %v560 = vadd.f32 %v541, %v559
    %v561 = vpop.f32.mrf.mxu0
    %v562 = vadd.f32 %v543, %v561
    %563 = vmatmul.bf16.gmra.mxu0 %v398
    %v564 = vpop.f32.mrf.mxu0
    %v565 = vadd.f32 %v546, %v564
    %v566 = vpop.f32.mrf.mxu0
    %v567 = vadd.f32 %v548, %v566
    %568 = vdwg.mxu0
    %v569 = vpack.c.bf16 %v560, %v560
    %v570 = vpack.c.bf16 %v562, %v562
    %v571 = vpack.c.bf16 %v565, %v565
    %v572 = vpack.c.bf16 %v567, %v567
    %573 = vst [vmem:[#allocation8] sm:$0xf] %v569
    %574 = vst [vmem:[#allocation8 + $0x4] sm:$0xf] %v570
    %575 = vst [vmem:[#allocation8 + $0x8] sm:$0xf] %v571
    %576 = vst [vmem:[#allocation8 + $0xc] sm:$0xf] %v572
    // Predicated region
    $region42: #{_lambda_.1} parent=1 // pred_check
      _
    $region43: #{_lambda_.1} parent=1 // pred_check_branch
      %578 = sbr.rel (0) target = $region45
    $region44: #{_lambda_.1} parent=1 // pred_region
      %580 = vsyncadd [#allocation4], 0
      %s581 = sshll.u32 [#allocation8], 4
      %s582 = int_to_ptr.vmem [resolvable:$true] %s581
      %s583 = sshll.u32 %s7, 4
      %s584 = int_to_ptr.hbm [resolvable:$true] %s583
      %589 = dma.vmem_to_hbm [thread:$0]  %s582, 256, %s584, [#allocation4], 64, 64, 4
    $region45: #{_lambda_.1} parent=1 // pred_fallthru
      _
    // Predicated region
    $region46: #{_lambda_.1} parent=1 // pred_check
      _
    $region47: #{_lambda_.1} parent=1 // pred_check_branch
      %591 = sbr.rel (0) target = $region49
    $region48: #{_lambda_.1} parent=1 // pred_region
      %593 = dma.done [#allocation4], 256
    $region49: #{_lambda_.1} parent=1 // pred_fallthru
      _
    %594 = vsyncpa [#allocation3], 1
    %595 = vsyncpa [#allocation6], 1
    %596 = vsyncpa [#allocation4], 1

</llo_original>
